<compile_context>
chip_gen: v7x
topology: tpu7x:2x2x1
jax: 0.10.0
libtpu: 0.0.40
codegen_flags: <defaults>
</compile_context>

<pallas_src>
import functools

import numpy as np
import jax
import jax.numpy as jnp
from jax.experimental import pallas as pl
from jax.experimental.pallas import tpu as pltpu  # noqa: F401  (not needed after grid removal)


def _bilinear_matrix(out_size, in_size):
    """Resize matrix matching F.interpolate(mode='bilinear', align_corners=False)
    on one spatial axis."""
    A = np.zeros((out_size, in_size), dtype=np.float32)
    scale = in_size / out_size
    for i in range(out_size):
        src = scale * (i + 0.5) - 0.5
        if src < 0.0:
            src = 0.0
        i0 = min(int(np.floor(src)), in_size - 1)
        i1 = min(i0 + 1, in_size - 1)
        lam = src - i0
        A[i, i0] += 1.0 - lam
        A[i, i1] += lam
    return A


def _projection_kernel(fuse_ref, wf_ref, mt_ref, bias_ref, out_ref):
    # fuse_ref : (C_in, N*Q)    bf16   all batches packed along lanes (col = b*Q + q)
    # wf_ref   : (C_out, C_in)  bf16   1x1 conv weight with BN scale folded in
    # mt_ref   : (Q, P)         bf16   combined bilinear resize matrix (transposed)
    # bias_ref : (N*C_out, 1)   f32    conv bias + BN shift folded in, tiled per batch
    # out_ref  : (N*C_out, P)   bf16   row = b*C_out + c  (reshape to (N,C_out,P) is free)
    c_out = wf_ref.shape[0]
    q = mt_ref.shape[0]
    n = out_ref.shape[0] // c_out

    # Folded 1x1 conv first (192 -> C_out channel reduction), lane-dense over all batches.
    y = jnp.dot(wf_ref[...], fuse_ref[...],
                preferred_element_type=jnp.float32)                    # (C_out, N*Q) f32
    y = y.astype(jnp.bfloat16)                                         # bf16 into the MXU (v5e)

    # Restack batches from lanes to rows: (C_out, N*Q) -> (N*C_out, Q).
    y_st = jnp.concatenate([y[:, b * q:(b + 1) * q] for b in range(n)], axis=0)

    # Bilinear resize (pixel expansion Q -> P), one matmul for every batch.
    o = jnp.dot(y_st, mt_ref[...],
                preferred_element_type=jnp.float32)                    # (N*C_out, P) f32

    # f32 epilogue: bias + leaky_relu (negative_slope = 0.01, F.leaky_relu default).
    o = o + bias_ref[...]
    o = jnp.where(o > 0, o, 0.01 * o)
    out_ref[...] = o.astype(out_ref.dtype)


@functools.partial(jax.jit, static_argnames=("h", "w"))
def _projection_impl(fuse, params, *, h, w):
    N, C_in, H_in, W_in = fuse.shape
    C_out = params["conv_w"].shape[0]
    Q = H_in * W_in
    P = h * w

    # Separable bilinear factors combined into one dense (Q, P) matrix (transposed).
    # Built with numpy at trace time -> compile-time constant under jit.  Fine at these
    # spatial sizes; for large h, w switch to the separable Ah/Aw two-matmul form.
    Ah = _bilinear_matrix(h, H_in)
    Aw = _bilinear_matrix(w, W_in)
    Mt = jnp.asarray(np.einsum("iy,jx->yxij", Ah, Aw).reshape(Q, P),
                     dtype=jnp.bfloat16)                                # (Q, P)

    # Fold BatchNorm (inference semantics, running stats) into the 1x1 conv.
    # TODO(synk): train-mode BN (batch statistics) is not implemented; eval-mode only.
    scale = params["bn_gamma"] / jnp.sqrt(params["bn_var"] + params["bn_eps"])
    w_f = (params["conv_w"][:, :, 0, 0] * scale[:, None]).astype(jnp.bfloat16)   # (C_out, C_in)
    b_f = (params["conv_b"] - params["bn_mean"]) * scale + params["bn_beta"]      # (C_out,)
    b_f = jnp.tile(b_f[:, None], (N, 1)).astype(jnp.float32)                      # (N*C_out, 1)

    # Pack all batches along the lane axis: (N, C_in, H, W) -> (C_in, N*Q).
    fuse_packed = jnp.transpose(fuse.reshape(N, C_in, Q), (1, 0, 2)).reshape(C_in, N * Q)
    fuse_packed = fuse_packed.astype(jnp.bfloat16)

    out_flat = pl.pallas_call(
        _projection_kernel,
        out_shape=jax.ShapeDtypeStruct((N * C_out, P), jnp.bfloat16),
        in_specs=[
            pl.BlockSpec((C_in, N * Q), lambda: (0, 0)),
            pl.BlockSpec((C_out, C_in), lambda: (0, 0)),
            pl.BlockSpec((Q, P), lambda: (0, 0)),
            pl.BlockSpec((N * C_out, 1), lambda: (0, 0)),
        ],
        out_specs=pl.BlockSpec((N * C_out, P), lambda: (0, 0)),
    )(fuse_packed, w_f, Mt, b_f)

    # (N*C_out, P) -> (N, C_out, h, w): contiguous reshape, no data movement.
    return out_flat.reshape(N, C_out, h, w)


def projection_forward(x_list, fuse, params):
    x0 = x_list[0]                       # (B, C, T, H, W); only h, w are used
    _, _, _, h, w = x0.shape

    # Faithful to the PyTorch module: `if fuse.shape[3] != h` — when equal, the module
    # returns fuse untouched (conv/BN/activation are skipped too).
    if fuse.shape[3] == h:
        return fuse

    # NOTE: this path returns bf16 (halves HBM writeback); cast outside if f32 is needed.
    return _projection_impl(fuse, params, h=h, w=w)


if __name__ == "__main__":
    key = jax.random.PRNGKey(0)
    k1, k2, k3, k4, k5 = jax.random.split(key, 5)

    C_in, C_out = 192, 64            # in_channel fixed at 192 by the module
    N, H_in, W_in = 2, 8, 8
    h, w = 16, 16                    # x[0] spatial size -> triggers the interpolate path

    params = {
        "conv_w": 0.05 * jax.random.normal(k1, (C_out, C_in, 1, 1), jnp.float32),
        "conv_b": 0.10 * jax.random.normal(k2, (C_out,), jnp.float32),
        "bn_gamma": 1.0 + 0.1 * jax.random.normal(k3, (C_out,), jnp.float32),
        "bn_beta": 0.1 * jax.random.normal(k4, (C_out,), jnp.float32),
        "bn_mean": 0.1 * jax.random.normal(k5, (C_out,), jnp.float32),
        "bn_var": jnp.ones((C_out,), jnp.float32),
        "bn_eps": 1e-5,
    }

    x0 = jax.random.normal(jax.random.PRNGKey(1), (N, 3, 4, h, w), jnp.float32)
    fuse = jax.random.normal(jax.random.PRNGKey(2), (N, C_in, H_in, W_in), jnp.float32)

    out = projection_forward([x0], fuse, params)
    out = jax.block_until_ready(out)
    assert out.shape == (N, C_out, h, w)
    assert out.dtype == jnp.bfloat16

    # Pure-JAX reference in the ORIGINAL op order (resize -> conv -> BN -> leaky_relu), f32.
    Ah = _bilinear_matrix(h, H_in)
    Aw = _bilinear_matrix(w, W_in)
    M = jnp.asarray(np.einsum("iy,jx->ijyx", Ah, Aw).reshape(h * w, H_in * W_in))
    resized = jnp.einsum("pq,ncq->ncp", M, fuse.reshape(N, C_in, H_in * W_in))
    conv = (jnp.einsum("oc,ncp->nop", params["conv_w"][:, :, 0, 0], resized)
            + params["conv_b"][None, :, None])
    scale = params["bn_gamma"] / jnp.sqrt(params["bn_var"] + params["bn_eps"])
    bn = ((conv - params["bn_mean"][None, :, None]) * scale[None, :, None]
          + params["bn_beta"][None, :, None])
    o_ref = jnp.where(bn > 0, bn, 0.01 * bn).reshape(N, C_out, h, w)

    # bf16 operands + bf16 output with f32 MXU accumulation -> loosened tolerance.
    np.testing.assert_allclose(np.asarray(out.astype(jnp.float32)), np.asarray(o_ref),
                               rtol=2e-2, atol=2e-2)

    print("KERNEL_OK")
</pallas_src>

<mosaic_0001>
module attributes {stable_mosaic.version = 11 : i64} {
  func.func @_projection_kernel(%arg0: memref<192x128xbf16, #tpu.memory_space<vmem>>, %arg1: memref<64x192xbf16, #tpu.memory_space<vmem>>, %arg2: memref<64x256xbf16, #tpu.memory_space<vmem>>, %arg3: memref<128x1xf32, #tpu.memory_space<vmem>>, %arg4: memref<128x256xbf16, #tpu.memory_space<vmem>>) attributes {dimension_semantics = [], scalar_prefetch = 0 : i64, scratch_operands = 0 : i64, tpu.core_type = #tpu.core_type<tc>} {
    %c0 = arith.constant 0 : index
    %c0_0 = arith.constant 0 : index
    %0 = vector.load %arg1[%c0, %c0_0] : memref<64x192xbf16, #tpu.memory_space<vmem>>, vector<64x192xbf16>
    %c0_1 = arith.constant 0 : index
    %c0_2 = arith.constant 0 : index
    %1 = vector.load %arg0[%c0_1, %c0_2] : memref<192x128xbf16, #tpu.memory_space<vmem>>, vector<192x128xbf16>
    %cst = arith.constant dense<0.000000e+00> : vector<64x128xf32>
    %2 = tpu.matmul %0, %1, %cst {dimension_numbers = #tpu.dot_dimension_numbers<[1], [0], [0], [1], [0, 0, 1, 1], [], []>} : vector<64x192xbf16>, vector<192x128xbf16>, vector<64x128xf32> -> vector<64x128xf32>
    %3 = arith.truncf %2 : vector<64x128xf32> to vector<64x128xbf16>
    %4 = vector.extract_strided_slice %3 {offsets = [0, 0], sizes = [64, 64], strides = [1, 1]} : vector<64x128xbf16> to vector<64x64xbf16>
    %5 = vector.extract_strided_slice %3 {offsets = [0, 64], sizes = [64, 64], strides = [1, 1]} : vector<64x128xbf16> to vector<64x64xbf16>
    %6 = tpu.concatenate %4, %5 in 0 : vector<64x64xbf16>, vector<64x64xbf16> -> vector<128x64xbf16>
    %c0_3 = arith.constant 0 : index
    %c0_4 = arith.constant 0 : index
    %7 = vector.load %arg2[%c0_3, %c0_4] : memref<64x256xbf16, #tpu.memory_space<vmem>>, vector<64x256xbf16>
    %cst_5 = arith.constant dense<0.000000e+00> : vector<128x256xf32>
    %8 = tpu.matmul %6, %7, %cst_5 {dimension_numbers = #tpu.dot_dimension_numbers<[1], [0], [0], [1], [0, 0, 1, 1], [], []>} : vector<128x64xbf16>, vector<64x256xbf16>, vector<128x256xf32> -> vector<128x256xf32>
    %c0_6 = arith.constant 0 : index
    %c0_7 = arith.constant 0 : index
    %9 = vector.load %arg3[%c0_6, %c0_7] : memref<128x1xf32, #tpu.memory_space<vmem>>, vector<128x1xf32>
    %10 = vector.broadcast %9 : vector<128x1xf32> to vector<128x256xf32>
    %11 = arith.addf %8, %10 : vector<128x256xf32>
    %cst_8 = arith.constant 0.000000e+00 : f32
    %12 = vector.broadcast %cst_8 : f32 to vector<128x256xf32>
    %13 = arith.cmpf ogt, %11, %12 : vector<128x256xf32>
    %cst_9 = arith.constant 0.00999999977 : f32
    %14 = vector.broadcast %cst_9 : f32 to vector<128x256xf32>
    %15 = arith.mulf %14, %11 : vector<128x256xf32>
    %16 = arith.select %13, %11, %15 : vector<128x256xi1>, vector<128x256xf32>
    %17 = arith.truncf %16 : vector<128x256xf32> to vector<128x256xbf16>
    %c0_10 = arith.constant 0 : index
    %c0_11 = arith.constant 0 : index
    %18 = vector.load %arg4[%c0_10, %c0_11] : memref<128x256xbf16, #tpu.memory_space<vmem>>, vector<128x256xbf16>
    tpu.vector_store %arg4[%c0_10, %c0_11], %17 {strides = array<i32>} : memref<128x256xbf16, #tpu.memory_space<vmem>>, vector<128x256xbf16>,
    return
  }
}

</mosaic_0001>

<llo_original>
// kernel: _projection_impl.1
$region0: #{_projection_impl.1}
  #allocation0 [shape = 'u32[]', space=smem, size = 0x4, offset = 0x4, fixed_abs, tag = 'smem constant byte address 0x4 - core index']
  #allocation1 [shape = 'u32[144,128]{1,0:T(1,128)}', space=vmem, size = 0x12000, scoped, tag = 'internal scratch']
  %s0 = inlined_call_operand.vmem [shape: bf16[192,128], index: 0, kind: input, shape index: {}]
  %s1 = inlined_call_operand.vmem [shape: bf16[64,192], index: 1, kind: input, shape index: {}]
  %s2 = inlined_call_operand.vmem [shape: bf16[64,256], index: 2, kind: input, shape index: {}]
  %s3 = inlined_call_operand.vmem [shape: f32[128,1], index: 3, kind: input, shape index: {}]
  %s4 = inlined_call_operand.vmem [shape: bf16[128,256], index: 4, kind: output, shape index: {}]
  %s5 = sld [smem:[#allocation0]]
  $region26: #{_projection_impl.1} parent=0
    _
  %s7 = ssub.s32 1, %s5
  %s8 = scalar_select 0, %s7, %s5
  // Predicated region
  $region2: #{_projection_impl.1} parent=0 // pred_check
    _
  $region3: #{_projection_impl.1} parent=0 // pred_check_branch
    %10 = sbr.rel (0) target = $region5
  $region4: #{_projection_impl.1} parent=0 // pred_region
    _
  $region5: #{_projection_impl.1} parent=0 // pred_fallthru
    _
  // Predicated region
  $region6: #{_projection_impl.1} parent=0 // pred_check
    _
  $region7: #{_projection_impl.1} parent=0 // pred_check_branch
    %12 = sbr.rel (0) target = $region9
  $region8: #{_projection_impl.1} parent=0 // pred_region
    _
  $region9: #{_projection_impl.1} parent=0 // pred_fallthru
    _
  // Predicated region
  $region10: #{_projection_impl.1} parent=0 // pred_check
    _
  $region11: #{_projection_impl.1} parent=0 // pred_check_branch
    %14 = sbr.rel (0) target = $region13
  $region12: #{_projection_impl.1} parent=0 // pred_region
    _
  $region13: #{_projection_impl.1} parent=0 // pred_fallthru
    _
  // Predicated region
  $region14: #{_projection_impl.1} parent=0 // pred_check
    _
  $region15: #{_projection_impl.1} parent=0 // pred_check_branch
    %16 = sbr.rel (0) target = $region17
  $region16: #{_projection_impl.1} parent=0 // pred_region
    _
  $region17: #{_projection_impl.1} parent=0 // pred_fallthru
    _
  %v18 = vld [vmem:[%s1] sm:$0xff]
  %v19 = vld [vmem:[%s1 + $0x8] sm:$0xff]
  %v20 = vld [vmem:[%s1 + $0x10] sm:$0xff]
  %v21 = vld [vmem:[%s1 + $0x18] sm:$0xff]
  %v22 = vld [vmem:[%s1 + $0x20] sm:$0xff]
  %v23 = vld [vmem:[%s1 + $0x28] sm:$0xff]
  %v24 = vld [vmem:[%s1 + $0x30] sm:$0xff]
  %v25 = vld [vmem:[%s1 + $0x38] sm:$0xff]
  %v26 = vld [vmem:[%s0] sm:$0xf]
  %v27 = vld [vmem:[%s0 + $0x4] sm:$0xf]
  %v28 = vld [vmem:[%s0 + $0x8] sm:$0xf]
  %v29 = vld [vmem:[%s0 + $0xc] sm:$0xf]
  %v30 = vld [vmem:[%s0 + $0x10] sm:$0xf]
  %v31 = vld [vmem:[%s0 + $0x14] sm:$0xf]
  %v32 = vld [vmem:[%s0 + $0x18] sm:$0xf]
  %v33 = vld [vmem:[%s0 + $0x1c] sm:$0xf]
  %v34 = vld [vmem:[%s0 + $0x20] sm:$0xf]
  %v35 = vld [vmem:[%s0 + $0x24] sm:$0xf]
  %v36 = vld [vmem:[%s0 + $0x28] sm:$0xf]
  %v37 = vld [vmem:[%s0 + $0x2c] sm:$0xf]
  %v38 = vld [vmem:[%s0 + $0x30] sm:$0xf]
  %v39 = vld [vmem:[%s0 + $0x34] sm:$0xf]
  %v40 = vld [vmem:[%s0 + $0x38] sm:$0xf]
  %v41 = vld [vmem:[%s0 + $0x3c] sm:$0xf]
  %v42 = vld [vmem:[%s0 + $0x40] sm:$0xf]
  %v43 = vld [vmem:[%s0 + $0x44] sm:$0xf]
  %v44 = vld [vmem:[%s0 + $0x48] sm:$0xf]
  %v45 = vld [vmem:[%s0 + $0x4c] sm:$0xf]
  %v46 = vld [vmem:[%s0 + $0x50] sm:$0xf]
  %v47 = vld [vmem:[%s0 + $0x54] sm:$0xf]
  %v48 = vld [vmem:[%s0 + $0x58] sm:$0xf]
  %v49 = vld [vmem:[%s0 + $0x5c] sm:$0xf]
  %v58 = vunpack.c.l.b16 %v18
  %v59 = vunpack.c.h.b16 %v18
  %v60 = vunpack.c.l.b16 %v19
  %v61 = vunpack.c.h.b16 %v19
  %v62 = vunpack.c.l.b16 %v20
  %v63 = vunpack.c.h.b16 %v20
  %v64 = vunpack.c.l.b16 %v21
  %v65 = vunpack.c.h.b16 %v21
  %v66 = vunpack.c.l.b16 %v22
  %v67 = vunpack.c.h.b16 %v22
  %v68 = vunpack.c.l.b16 %v23
  %v69 = vunpack.c.h.b16 %v23
  %v70 = vunpack.c.l.b16 %v24
  %v71 = vunpack.c.h.b16 %v24
  %v72 = vunpack.c.l.b16 %v25
  %v73 = vunpack.c.h.b16 %v25
  %v74 = vpack.c.b16 %v60, %v58
  %v75 = vpack.c.b16 %v61, %v59
  %v76 = vpack.c.b16 %v64, %v62
  %v77 = vpack.c.b16 %v65, %v63
  %v78 = vpack.c.b16 %v68, %v66
  %v79 = vpack.c.b16 %v69, %v67
  %v80 = vpack.c.b16 %v72, %v70
  %v81 = vpack.c.b16 %v73, %v71
  %v110 = vunpack.c.l.b16 %v26
  %v111 = vunpack.c.l.b16 %v27
  %v112 = vunpack.c.l.b16 %v28
  %v113 = vunpack.c.l.b16 %v29
  %v114 = vunpack.c.l.b16 %v30
  %v115 = vunpack.c.l.b16 %v31
  %v116 = vunpack.c.l.b16 %v32
  %v117 = vunpack.c.l.b16 %v33
  %v118 = vunpack.c.l.b16 %v34
  %v119 = vunpack.c.l.b16 %v35
  %v120 = vunpack.c.l.b16 %v36
  %v121 = vunpack.c.l.b16 %v37
  %v122 = vunpack.c.l.b16 %v38
  %v123 = vunpack.c.l.b16 %v39
  %v124 = vunpack.c.l.b16 %v40
  %v125 = vunpack.c.l.b16 %v41
  %v126 = vunpack.c.l.b16 %v42
  %v127 = vunpack.c.l.b16 %v43
  %v128 = vunpack.c.l.b16 %v44
  %v129 = vunpack.c.l.b16 %v45
  %v130 = vunpack.c.l.b16 %v46
  %v131 = vunpack.c.l.b16 %v47
  %v132 = vunpack.c.l.b16 %v48
  %v133 = vunpack.c.l.b16 %v49
  %v134 = vpack.c.b16 %v111, %v110
  %v135 = vpack.c.b16 %v113, %v112
  %v136 = vpack.c.b16 %v115, %v114
  %v137 = vpack.c.b16 %v117, %v116
  %v138 = vpack.c.b16 %v119, %v118
  %v139 = vpack.c.b16 %v121, %v120
  %v140 = vpack.c.b16 %v123, %v122
  %v141 = vpack.c.b16 %v125, %v124
  %v142 = vpack.c.b16 %v127, %v126
  %v143 = vpack.c.b16 %v129, %v128
  %v144 = vpack.c.b16 %v131, %v130
  %v145 = vpack.c.b16 %v133, %v132
  %vm158 = vcmask 523264
  %v160 = vsel %vm158, %v75, 0
  %v163 = vsel %vm158, %v77, 0
  %v166 = vsel %vm158, %v79, 0
  %v169 = vsel %vm158, %v81, 0
  %171 = vmatprep.subr.bf16.mxu0 0
  %172 = vmatpush1.bf16.msra.mxu0 %v134
  %173 = vmatprep.subr.bf16.mxu0 0
  %174 = vmatpush1.bf16.msra.mxu0 %v135
  %175 = vmatprep.subr.bf16.mxu0 0
  %176 = vmatpush1.bf16.msra.mxu0 %v136
  %177 = vmatprep.subr.bf16.mxu0 0
  %178 = vmatpush1.bf16.msra.mxu0 %v137
  %179 = vmatprep.subr.bf16.mxu0 0
  %180 = vmatpush1.bf16.msra.mxu0 %v138
  %181 = vmatprep.subr.bf16.mxu0 0
  %182 = vmatpush1.bf16.msra.mxu0 %v139
  %183 = vmatprep.subr.bf16.mxu0 0
  %184 = vmatpush1.bf16.msra.mxu0 %v140
  %185 = vmatprep.subr.bf16.mxu0 0
  %186 = vmatpush1.bf16.msra.mxu0 %v141
  %187 = vmatprep.subr.bf16.mxu0 0
  %188 = vmatpush1.bf16.msra.mxu0 %v142
  %189 = vmatprep.subr.bf16.mxu0 0
  %190 = vmatpush1.bf16.msra.mxu0 %v143
  %191 = vmatprep.subr.bf16.mxu0 0
  %192 = vmatpush1.bf16.msra.mxu0 %v144
  %193 = vmatprep.subr.bf16.mxu0 0
  %194 = vmatpush1.bf16.msra.mxu0 %v145
  %195 = vmatprep.subr.bf16.mxu0 0
  %196 = vmatpush1.bf16.msra.mxu0 0
  %197 = vmatprep.subr.bf16.mxu0 0
  %198 = vmatpush1.bf16.msra.mxu0 0
  %199 = vmatprep.subr.bf16.mxu0 0
  %200 = vmatpush1.bf16.msra.mxu0 0
  %201 = vmatprep.subr.bf16.mxu0 0
  %202 = vmatpush1.bf16.msra.mxu0 0
  %203 = vmatprep.mubr.bf16.mxu0 %v160
  %204 = vmatmul.mubr.bf16.gmra.mrb[0].mxu0 %v74
  %v205 = vpop.f32.mrb[0].mxu0
  %v206 = vadd.f32 0.0, %v205
  %v207 = vpop.f32.mrb[0].mxu0
  %v208 = vpop.f32.mrb[0].mxu0
  %v209 = vadd.f32 0.0, %v208
  %v210 = vpop.f32.mrb[0].mxu0
  %211 = vmatprep.mubr.bf16.mxu0 %v163
  %212 = vmatmul.mubr.bf16.gmra.mrb[0].mxu0 %v76
  %v213 = vpop.f32.mrb[0].mxu0
  %v214 = vadd.f32 0.0, %v213
  %v215 = vpop.f32.mrb[0].mxu0
  %v216 = vpop.f32.mrb[0].mxu0
  %v217 = vadd.f32 0.0, %v216
  %v218 = vpop.f32.mrb[0].mxu0
  %219 = vmatprep.mubr.bf16.mxu0 %v166
  %220 = vmatmul.mubr.bf16.gmra.mrb[0].mxu0 %v78
  %v221 = vpop.f32.mrb[0].mxu0
  %v222 = vadd.f32 0.0, %v221
  %v223 = vpop.f32.mrb[0].mxu0
  %v224 = vpop.f32.mrb[0].mxu0
  %v225 = vadd.f32 0.0, %v224
  %v226 = vpop.f32.mrb[0].mxu0
  %227 = vmatprep.mubr.bf16.mxu0 %v169
  %228 = vmatmul.mubr.bf16.gmra.mrb[0].mxu0 %v80
  %v229 = vpop.f32.mrb[0].mxu0
  %v230 = vadd.f32 0.0, %v229
  %v231 = vpop.f32.mrb[0].mxu0
  %v232 = vpop.f32.mrb[0].mxu0
  %v233 = vadd.f32 0.0, %v232
  %v234 = vpop.f32.mrb[0].mxu0
  %235 = vdwg.mxu0
  %v236 = vpack.c.bf16 %v209, %v206
  %v237 = vpack.c.bf16 %v217, %v214
  %v238 = vpack.c.bf16 %v225, %v222
  %v239 = vpack.c.bf16 %v233, %v230
  %244 = vrot.lane.b32.xlu0 %v236, 64
  %v245 = vpop.permute.xlu0 %244
  %246 = vrot.lane.b32.xlu0 %v237, 64
  %v247 = vpop.permute.xlu0 %246
  %248 = vrot.lane.b32.xlu0 %v238, 64
  %v249 = vpop.permute.xlu0 %248
  %250 = vrot.lane.b32.xlu0 %v239, 64
  %v251 = vpop.permute.xlu0 %250
  %v252 = vld [vmem:[%s2] sm:$0xff]
  %v253 = vld [vmem:[%s2 + $0x8] sm:$0xff]
  %v254 = vld [vmem:[%s2 + $0x10] sm:$0xff]
  %v255 = vld [vmem:[%s2 + $0x18] sm:$0xff]
  %v256 = vld [vmem:[%s2 + $0x20] sm:$0xff]
  %v257 = vld [vmem:[%s2 + $0x28] sm:$0xff]
  %v258 = vld [vmem:[%s2 + $0x30] sm:$0xff]
  %v259 = vld [vmem:[%s2 + $0x38] sm:$0xff]
  %v260 = vld [vmem:[%s3] sm:$0xff]
  %v261 = vld [vmem:[%s3 + $0x8] sm:$0xff]
  %v262 = vld [vmem:[%s3 + $0x10] sm:$0xff]
  %v263 = vld [vmem:[%s3 + $0x18] sm:$0xff]
  %v264 = vld [vmem:[%s3 + $0x20] sm:$0xff]
  %v265 = vld [vmem:[%s3 + $0x28] sm:$0xff]
  %v266 = vld [vmem:[%s3 + $0x30] sm:$0xff]
  %v267 = vld [vmem:[%s3 + $0x38] sm:$0xff]
  %v268 = vld [vmem:[%s3 + $0x40] sm:$0xff]
  %v269 = vld [vmem:[%s3 + $0x48] sm:$0xff]
  %v270 = vld [vmem:[%s3 + $0x50] sm:$0xff]
  %v271 = vld [vmem:[%s3 + $0x58] sm:$0xff]
  %v272 = vld [vmem:[%s3 + $0x60] sm:$0xff]
  %v273 = vld [vmem:[%s3 + $0x68] sm:$0xff]
  %v274 = vld [vmem:[%s3 + $0x70] sm:$0xff]
  %v275 = vld [vmem:[%s3 + $0x78] sm:$0xff]
  %277 = vset.pattern.permute.xlu0 0
  %278 = vperm.xlu0 %277, %v260
  %v279 = vpop.permute.xlu0 %278
  %282 = vset.pattern.permute.xlu0 0
  %283 = vperm.xlu0 %282, %v261
  %v284 = vpop.permute.xlu0 %283
  %287 = vset.pattern.permute.xlu0 0
  %288 = vperm.xlu0 %287, %v262
  %v289 = vpop.permute.xlu0 %288
  %292 = vset.pattern.permute.xlu0 0
  %293 = vperm.xlu0 %292, %v263
  %v294 = vpop.permute.xlu0 %293
  %297 = vset.pattern.permute.xlu0 0
  %298 = vperm.xlu0 %297, %v264
  %v299 = vpop.permute.xlu0 %298
  %302 = vset.pattern.permute.xlu0 0
  %303 = vperm.xlu0 %302, %v265
  %v304 = vpop.permute.xlu0 %303
  %307 = vset.pattern.permute.xlu0 0
  %308 = vperm.xlu0 %307, %v266
  %v309 = vpop.permute.xlu0 %308
  %312 = vset.pattern.permute.xlu0 0
  %313 = vperm.xlu0 %312, %v267
  %v314 = vpop.permute.xlu0 %313
  %317 = vset.pattern.permute.xlu0 0
  %318 = vperm.xlu0 %317, %v268
  %v319 = vpop.permute.xlu0 %318
  %322 = vset.pattern.permute.xlu0 0
  %323 = vperm.xlu0 %322, %v269
  %v324 = vpop.permute.xlu0 %323
  %327 = vset.pattern.permute.xlu0 0
  %328 = vperm.xlu0 %327, %v270
  %v329 = vpop.permute.xlu0 %328
  %332 = vset.pattern.permute.xlu0 0
  %333 = vperm.xlu0 %332, %v271
  %v334 = vpop.permute.xlu0 %333
  %337 = vset.pattern.permute.xlu0 0
  %338 = vperm.xlu0 %337, %v272
  %v339 = vpop.permute.xlu0 %338
  %342 = vset.pattern.permute.xlu0 0
  %343 = vperm.xlu0 %342, %v273
  %v344 = vpop.permute.xlu0 %343
  %347 = vset.pattern.permute.xlu0 0
  %348 = vperm.xlu0 %347, %v274
  %v349 = vpop.permute.xlu0 %348
  %352 = vset.pattern.permute.xlu0 0
  %353 = vperm.xlu0 %352, %v275
  %v354 = vpop.permute.xlu0 %353
  %v364 = vunpack.c.l.b16 %v252
  %v365 = vunpack.c.h.b16 %v252
  %v366 = vunpack.c.l.b16 %v253
  %v367 = vunpack.c.h.b16 %v253
  %v368 = vunpack.c.l.b16 %v254
  %v369 = vunpack.c.h.b16 %v254
  %v370 = vunpack.c.l.b16 %v255
  %v371 = vunpack.c.h.b16 %v255
  %v372 = vunpack.c.l.b16 %v256
  %v373 = vunpack.c.h.b16 %v256
  %v374 = vunpack.c.l.b16 %v257
  %v375 = vunpack.c.h.b16 %v257
  %v376 = vunpack.c.l.b16 %v258
  %v377 = vunpack.c.h.b16 %v258
  %v378 = vunpack.c.l.b16 %v259
  %v379 = vunpack.c.h.b16 %v259
  %v380 = vpack.c.b16 %v366, %v364
  %v381 = vpack.c.b16 %v367, %v365
  %v382 = vpack.c.b16 %v370, %v368
  %v383 = vpack.c.b16 %v371, %v369
  %v384 = vpack.c.b16 %v374, %v372
  %v385 = vpack.c.b16 %v375, %v373
  %v386 = vpack.c.b16 %v378, %v376
  %v387 = vpack.c.b16 %v379, %v377
  %v397 = vsel %vm158, %v236, 0
  %v400 = vsel %vm158, %v237, 0
  %v403 = vsel %vm158, %v238, 0
  %v406 = vsel %vm158, %v239, 0
  %v409 = vsel %vm158, %v245, 0
  %v412 = vsel %vm158, %v247, 0
  %v415 = vsel %vm158, %v249, 0
  %v418 = vsel %vm158, %v251, 0
  %420 = vmatprep.subr.bf16.mxu0 %v381
  %421 = vmatpush1.bf16.msra.mxu0 %v380
  %422 = vmatprep.subr.bf16.mxu0 %v383
  %423 = vmatpush1.bf16.msra.mxu0 %v382
  %424 = vmatprep.subr.bf16.mxu0 %v385
  %425 = vmatpush1.bf16.msra.mxu0 %v384
  %426 = vmatprep.subr.bf16.mxu0 %v387
  %427 = vmatpush1.bf16.msra.mxu0 %v386
  %428 = vmatprep.subr.bf16.mxu0 0
  %429 = vmatpush1.bf16.msra.mxu0 0
  %430 = vmatprep.subr.bf16.mxu0 0
  %431 = vmatpush1.bf16.msra.mxu0 0
  %432 = vmatprep.subr.bf16.mxu0 0
  %433 = vmatpush1.bf16.msra.mxu0 0
  %434 = vmatprep.subr.bf16.mxu0 0
  %435 = vmatpush1.bf16.msra.mxu0 0
  %436 = vmatprep.subr.bf16.mxu0 0
  %437 = vmatpush1.bf16.msra.mxu0 0
  %438 = vmatprep.subr.bf16.mxu0 0
  %439 = vmatpush1.bf16.msra.mxu0 0
  %440 = vmatprep.subr.bf16.mxu0 0
  %441 = vmatpush1.bf16.msra.mxu0 0
  %442 = vmatprep.subr.bf16.mxu0 0
  %443 = vmatpush1.bf16.msra.mxu0 0
  %444 = vmatprep.subr.bf16.mxu0 0
  %445 = vmatpush1.bf16.msra.mxu0 0
  %446 = vmatprep.subr.bf16.mxu0 0
  %447 = vmatpush1.bf16.msra.mxu0 0
  %448 = vmatprep.subr.bf16.mxu0 0
  %449 = vmatpush1.bf16.msra.mxu0 0
  %450 = vmatprep.subr.bf16.mxu0 0
  %451 = vmatpush1.bf16.msra.mxu0 0
  %452 = vmatprep.mubr.bf16.mxu0 0
  %453 = vmatmul.mubr.bf16.gmra.mrb[0].mxu0 %v397
  %v454 = vpop.f32.mrb[0].mxu0
  %v455 = vadd.f32 %v279, %v454
  %v456 = vpop.f32.mrb[0].mxu0
  %v457 = vadd.f32 %v279, %v456
  %v458 = vpop.f32.mrb[0].mxu0
  %v459 = vadd.f32 %v284, %v458
  %v460 = vpop.f32.mrb[0].mxu0
  %v461 = vadd.f32 %v284, %v460
  %462 = vmatprep.mubr.bf16.mxu0 0
  %463 = vmatmul.mubr.bf16.gmra.mrb[0].mxu0 %v400
  %v464 = vpop.f32.mrb[0].mxu0
  %v465 = vadd.f32 %v289, %v464
  %v466 = vpop.f32.mrb[0].mxu0
  %v467 = vadd.f32 %v289, %v466
  %v468 = vpop.f32.mrb[0].mxu0
  %v469 = vadd.f32 %v294, %v468
  %v470 = vpop.f32.mrb[0].mxu0
  %v471 = vadd.f32 %v294, %v470
  %472 = vmatprep.mubr.bf16.mxu0 0
  %473 = vmatmul.mubr.bf16.gmra.mrb[0].mxu0 %v403
  %v474 = vpop.f32.mrb[0].mxu0
  %v475 = vadd.f32 %v299, %v474
  %v476 = vpop.f32.mrb[0].mxu0
  %v477 = vadd.f32 %v299, %v476
  %v478 = vpop.f32.mrb[0].mxu0
  %v479 = vadd.f32 %v304, %v478
  %v480 = vpop.f32.mrb[0].mxu0
  %v481 = vadd.f32 %v304, %v480
  %482 = vmatprep.mubr.bf16.mxu0 0
  %483 = vmatmul.mubr.bf16.gmra.mrb[0].mxu0 %v406
  %v484 = vpop.f32.mrb[0].mxu0
  %v485 = vadd.f32 %v309, %v484
  %v486 = vpop.f32.mrb[0].mxu0
  %v487 = vadd.f32 %v309, %v486
  %v488 = vpop.f32.mrb[0].mxu0
  %v489 = vadd.f32 %v314, %v488
  %v490 = vpop.f32.mrb[0].mxu0
  %v491 = vadd.f32 %v314, %v490
  %492 = vmatprep.mubr.bf16.mxu0 0
  %493 = vmatmul.mubr.bf16.gmra.mrb[0].mxu0 %v409
  %v494 = vpop.f32.mrb[0].mxu0
  %v495 = vadd.f32 %v319, %v494
  %v496 = vpop.f32.mrb[0].mxu0
  %v497 = vadd.f32 %v319, %v496
  %v498 = vpop.f32.mrb[0].mxu0
  %v499 = vadd.f32 %v324, %v498
  %v500 = vpop.f32.mrb[0].mxu0
  %v501 = vadd.f32 %v324, %v500
  %502 = vmatprep.mubr.bf16.mxu0 0
  %503 = vmatmul.mubr.bf16.gmra.mrb[0].mxu0 %v412
  %v504 = vpop.f32.mrb[0].mxu0
  %v505 = vadd.f32 %v329, %v504
  %v506 = vpop.f32.mrb[0].mxu0
  %v507 = vadd.f32 %v329, %v506
  %v508 = vpop.f32.mrb[0].mxu0
  %v509 = vadd.f32 %v334, %v508
  %v510 = vpop.f32.mrb[0].mxu0
  %v511 = vadd.f32 %v334, %v510
  %512 = vmatprep.mubr.bf16.mxu0 0
  %513 = vmatmul.mubr.bf16.gmra.mrb[0].mxu0 %v415
  %v514 = vpop.f32.mrb[0].mxu0
  %v515 = vadd.f32 %v339, %v514
  %v516 = vpop.f32.mrb[0].mxu0
  %v517 = vadd.f32 %v339, %v516
  %v518 = vpop.f32.mrb[0].mxu0
  %v519 = vadd.f32 %v344, %v518
  %v520 = vpop.f32.mrb[0].mxu0
  %v521 = vadd.f32 %v344, %v520
  %522 = vmatprep.mubr.bf16.mxu0 0
  %523 = vmatmul.mubr.bf16.gmra.mrb[0].mxu0 %v418
  %v524 = vpop.f32.mrb[0].mxu0
  %v525 = vadd.f32 %v349, %v524
  %v526 = vpop.f32.mrb[0].mxu0
  %v527 = vadd.f32 %v349, %v526
  %v528 = vpop.f32.mrb[0].mxu0
  %v529 = vadd.f32 %v354, %v528
  %v530 = vpop.f32.mrb[0].mxu0
  %v531 = vadd.f32 %v354, %v530
  %532 = vdwg.mxu0
  %vm533 = vcmp.gt.f32.partialorder %v455, 0.0
  %vm534 = vcmp.gt.f32.partialorder %v457, 0.0
  %vm535 = vcmp.gt.f32.partialorder %v459, 0.0
  %vm536 = vcmp.gt.f32.partialorder %v461, 0.0
  %vm537 = vcmp.gt.f32.partialorder %v465, 0.0
  %vm538 = vcmp.gt.f32.partialorder %v467, 0.0
  %vm539 = vcmp.gt.f32.partialorder %v469, 0.0
  %vm540 = vcmp.gt.f32.partialorder %v471, 0.0
  %vm541 = vcmp.gt.f32.partialorder %v475, 0.0
  %vm542 = vcmp.gt.f32.partialorder %v477, 0.0
  %vm543 = vcmp.gt.f32.partialorder %v479, 0.0
  %vm544 = vcmp.gt.f32.partialorder %v481, 0.0
  %vm545 = vcmp.gt.f32.partialorder %v485, 0.0
  %vm546 = vcmp.gt.f32.partialorder %v487, 0.0
  %vm547 = vcmp.gt.f32.partialorder %v489, 0.0
  %vm548 = vcmp.gt.f32.partialorder %v491, 0.0
  %vm549 = vcmp.gt.f32.partialorder %v495, 0.0
  %vm550 = vcmp.gt.f32.partialorder %v497, 0.0
  %vm551 = vcmp.gt.f32.partialorder %v499, 0.0
  %vm552 = vcmp.gt.f32.partialorder %v501, 0.0
  %vm553 = vcmp.gt.f32.partialorder %v505, 0.0
  %vm554 = vcmp.gt.f32.partialorder %v507, 0.0
  %vm555 = vcmp.gt.f32.partialorder %v509, 0.0
  %vm556 = vcmp.gt.f32.partialorder %v511, 0.0
  %vm557 = vcmp.gt.f32.partialorder %v515, 0.0
  %vm558 = vcmp.gt.f32.partialorder %v517, 0.0
  %vm559 = vcmp.gt.f32.partialorder %v519, 0.0
  %vm560 = vcmp.gt.f32.partialorder %v521, 0.0
  %vm561 = vcmp.gt.f32.partialorder %v525, 0.0
  %vm562 = vcmp.gt.f32.partialorder %v527, 0.0
  %vm563 = vcmp.gt.f32.partialorder %v529, 0.0
  %vm564 = vcmp.gt.f32.partialorder %v531, 0.0
  %v565 = vmul.f32 %v455, 0.01
  %v566 = vmul.f32 %v457, 0.01
  %v567 = vmul.f32 %v459, 0.01
  %v568 = vmul.f32 %v461, 0.01
  %v569 = vmul.f32 %v465, 0.01
  %v570 = vmul.f32 %v467, 0.01
  %v571 = vmul.f32 %v469, 0.01
  %v572 = vmul.f32 %v471, 0.01
  %v573 = vmul.f32 %v475, 0.01
  %v574 = vmul.f32 %v477, 0.01
  %v575 = vmul.f32 %v479, 0.01
  %v576 = vmul.f32 %v481, 0.01
  %v577 = vmul.f32 %v485, 0.01
  %v578 = vmul.f32 %v487, 0.01
  %v579 = vmul.f32 %v489, 0.01
  %v580 = vmul.f32 %v491, 0.01
  %v581 = vmul.f32 %v495, 0.01
  %v582 = vmul.f32 %v497, 0.01
  %v583 = vmul.f32 %v499, 0.01
  %v584 = vmul.f32 %v501, 0.01
  %v585 = vmul.f32 %v505, 0.01
  %v586 = vmul.f32 %v507, 0.01
  %v587 = vmul.f32 %v509, 0.01
  %v588 = vmul.f32 %v511, 0.01
  %v589 = vmul.f32 %v515, 0.01
  %v590 = vmul.f32 %v517, 0.01
  %v591 = vmul.f32 %v519, 0.01
  %v592 = vmul.f32 %v521, 0.01
  %v593 = vmul.f32 %v525, 0.01
  %v594 = vmul.f32 %v527, 0.01
  %v595 = vmul.f32 %v529, 0.01
  %v596 = vmul.f32 %v531, 0.01
  %v597 = vsel %vm533, %v455, %v565
  %v598 = vsel %vm534, %v457, %v566
  %v599 = vsel %vm535, %v459, %v567
  %v600 = vsel %vm536, %v461, %v568
  %v601 = vsel %vm537, %v465, %v569
  %v602 = vsel %vm538, %v467, %v570
  %v603 = vsel %vm539, %v469, %v571
  %v604 = vsel %vm540, %v471, %v572
  %v605 = vsel %vm541, %v475, %v573
  %v606 = vsel %vm542, %v477, %v574
  %v607 = vsel %vm543, %v479, %v575
  %v608 = vsel %vm544, %v481, %v576
  %v609 = vsel %vm545, %v485, %v577
  %v610 = vsel %vm546, %v487, %v578
  %v611 = vsel %vm547, %v489, %v579
  %v612 = vsel %vm548, %v491, %v580
  %v613 = vsel %vm549, %v495, %v581
  %v614 = vsel %vm550, %v497, %v582
  %v615 = vsel %vm551, %v499, %v583
  %v616 = vsel %vm552, %v501, %v584
  %v617 = vsel %vm553, %v505, %v585
  %v618 = vsel %vm554, %v507, %v586
  %v619 = vsel %vm555, %v509, %v587
  %v620 = vsel %vm556, %v511, %v588
  %v621 = vsel %vm557, %v515, %v589
  %v622 = vsel %vm558, %v517, %v590
  %v623 = vsel %vm559, %v519, %v591
  %v624 = vsel %vm560, %v521, %v592
  %v625 = vsel %vm561, %v525, %v593
  %v626 = vsel %vm562, %v527, %v594
  %v627 = vsel %vm563, %v529, %v595
  %v628 = vsel %vm564, %v531, %v596
  %v629 = vpack.c.bf16 %v599, %v597
  %v630 = vpack.c.bf16 %v600, %v598
  %v631 = vpack.c.bf16 %v603, %v601
  %v632 = vpack.c.bf16 %v604, %v602
  %v633 = vpack.c.bf16 %v607, %v605
  %v634 = vpack.c.bf16 %v608, %v606
  %v635 = vpack.c.bf16 %v611, %v609
  %v636 = vpack.c.bf16 %v612, %v610
  %v637 = vpack.c.bf16 %v615, %v613
  %v638 = vpack.c.bf16 %v616, %v614
  %v639 = vpack.c.bf16 %v619, %v617
  %v640 = vpack.c.bf16 %v620, %v618
  %v641 = vpack.c.bf16 %v623, %v621
  %v642 = vpack.c.bf16 %v624, %v622
  %v643 = vpack.c.bf16 %v627, %v625
  %v644 = vpack.c.bf16 %v628, %v626
  %v661 = vunpack.c.l.b16 %v629
  %v662 = vunpack.c.l.b16 %v630
  %v663 = vunpack.c.h.b16 %v629
  %v664 = vunpack.c.h.b16 %v630
  %v665 = vunpack.c.l.b16 %v631
  %v666 = vunpack.c.l.b16 %v632
  %v667 = vunpack.c.h.b16 %v631
  %v668 = vunpack.c.h.b16 %v632
  %v669 = vunpack.c.l.b16 %v633
  %v670 = vunpack.c.l.b16 %v634
  %v671 = vunpack.c.h.b16 %v633
  %v672 = vunpack.c.h.b16 %v634
  %v673 = vunpack.c.l.b16 %v635
  %v674 = vunpack.c.l.b16 %v636
  %v675 = vunpack.c.h.b16 %v635
  %v676 = vunpack.c.h.b16 %v636
  %v677 = vunpack.c.l.b16 %v637
  %v678 = vunpack.c.l.b16 %v638
  %v679 = vunpack.c.h.b16 %v637
  %v680 = vunpack.c.h.b16 %v638
  %v681 = vunpack.c.l.b16 %v639
  %v682 = vunpack.c.l.b16 %v640
  %v683 = vunpack.c.h.b16 %v639
  %v684 = vunpack.c.h.b16 %v640
  %v685 = vunpack.c.l.b16 %v641
  %v686 = vunpack.c.l.b16 %v642
  %v687 = vunpack.c.h.b16 %v641
  %v688 = vunpack.c.h.b16 %v642
  %v689 = vunpack.c.l.b16 %v643
  %v690 = vunpack.c.l.b16 %v644
  %v691 = vunpack.c.h.b16 %v643
  %v692 = vunpack.c.h.b16 %v644
  %v693 = vpack.c.b16 %v662, %v661
  %v694 = vpack.c.b16 %v664, %v663
  %v695 = vpack.c.b16 %v666, %v665
  %v696 = vpack.c.b16 %v668, %v667
  %v697 = vpack.c.b16 %v670, %v669
  %v698 = vpack.c.b16 %v672, %v671
  %v699 = vpack.c.b16 %v674, %v673
  %v700 = vpack.c.b16 %v676, %v675
  %v701 = vpack.c.b16 %v678, %v677
  %v702 = vpack.c.b16 %v680, %v679
  %v703 = vpack.c.b16 %v682, %v681
  %v704 = vpack.c.b16 %v684, %v683
  %v705 = vpack.c.b16 %v686, %v685
  %v706 = vpack.c.b16 %v688, %v687
  %v707 = vpack.c.b16 %v690, %v689
  %v708 = vpack.c.b16 %v692, %v691
  %725 = vst [vmem:[%s4] sm:$0xff] %v693
  %726 = vst [vmem:[%s4 + $0x8] sm:$0xff] %v694
  %727 = vst [vmem:[%s4 + $0x10] sm:$0xff] %v695
  %728 = vst [vmem:[%s4 + $0x18] sm:$0xff] %v696
  %729 = vst [vmem:[%s4 + $0x20] sm:$0xff] %v697
  %730 = vst [vmem:[%s4 + $0x28] sm:$0xff] %v698
  %731 = vst [vmem:[%s4 + $0x30] sm:$0xff] %v699
  %732 = vst [vmem:[%s4 + $0x38] sm:$0xff] %v700
  %733 = vst [vmem:[%s4 + $0x40] sm:$0xff] %v701
  %734 = vst [vmem:[%s4 + $0x48] sm:$0xff] %v702
  %735 = vst [vmem:[%s4 + $0x50] sm:$0xff] %v703
  %736 = vst [vmem:[%s4 + $0x58] sm:$0xff] %v704
  %737 = vst [vmem:[%s4 + $0x60] sm:$0xff] %v705
  %738 = vst [vmem:[%s4 + $0x68] sm:$0xff] %v706
  %739 = vst [vmem:[%s4 + $0x70] sm:$0xff] %v707
  %740 = vst [vmem:[%s4 + $0x78] sm:$0xff] %v708
  // Predicated region
  $region18: #{_projection_impl.1} parent=0 // pred_check
    _
  $region19: #{_projection_impl.1} parent=0 // pred_check_branch
    %742 = sbr.rel (0) target = $region21
  $region20: #{_projection_impl.1} parent=0 // pred_region
    _
  $region21: #{_projection_impl.1} parent=0 // pred_fallthru
    _
  // Predicated region
  $region22: #{_projection_impl.1} parent=0 // pred_check
    _
  $region23: #{_projection_impl.1} parent=0 // pred_check_branch
    %744 = sbr.rel (0) target = $region25
  $region24: #{_projection_impl.1} parent=0 // pred_region
    _
  $region25: #{_projection_impl.1} parent=0 // pred_fallthru
    _

</llo_original>
